<compile_context>
chip_gen: v6e
topology: v6e:2x2x1
jax: 0.10.0
libtpu: 0.0.40
codegen_flags: <defaults>
</compile_context>

<pallas_src>
import jax
import jax.numpy as jnp
import numpy as np
from jax.experimental import pallas as pl
from jax.experimental.pallas import tpu as pltpu

_LANE = 128
_SUBLANE = 8
# ~8 MiB per (t_s, t_bh) buffer: x + out, each double-buffered -> ~32 MiB VMEM,
# comfortably inside the 48 MiB scoped limit requested below (v7x physical
# VMEM is 64 MiB; v5e/v6e have 128 MiB).
_TILE_BUDGET_BYTES = 8 * 1024 * 1024
_VMEM_LIMIT_BYTES = 48 * 1024 * 1024


def _locked_dropout_kernel(mask_ref, x_ref, o_ref):
    # mask_ref is the same (1, t_bh) row at every S-step -> mask locked over
    # time.  Multiply natively in x's dtype; the mask already holds 1/(1-p).
    o_ref[...] = x_ref[...] * mask_ref[...]


def _round_up(n, m):
    return -(-n // m) * m


def _choose_tiles(S, BH, itemsize, budget_bytes=_TILE_BUDGET_BYTES):
    """Pick (t_s, t_bh) for the [S, BH] streaming multiply.

    * t_bh: multiple of 128 lanes; the full BH extent when a minimal 8-row
      block still fits the byte budget, otherwise tiled so very large B*H
      never exceeds VMEM.
    * t_s: multiple of 8 sublanes (or the full S), sized purely by bytes; if
      it would cover all of S, split so the "parallel" S axis has >= 2 grid
      steps and both v7x TensorCores are used.
    """
    if BH * _SUBLANE * itemsize <= budget_bytes:
        t_bh = BH
    else:
        t_bh = max(_LANE, (budget_bytes // (_SUBLANE * itemsize) // _LANE) * _LANE)

    rows = budget_bytes // max(1, t_bh * itemsize)
    rows = max(_SUBLANE, (rows // _SUBLANE) * _SUBLANE)
    t_s = S if rows >= S else rows

    # Ensure >= 2 S-steps whenever S is big enough to split into 8-row blocks.
    if t_s >= S and S > _SUBLANE:
        half = _round_up((S + 1) // 2, _SUBLANE)
        if half < S:
            t_s = half
    return t_s, t_bh


def locked_dropout(x, seed, p=0.5, training=True):
    """JAX/Pallas equivalent of LockedDropout.forward.

    Args:
      x: float array of shape [S, B, H] (sequence, batch, rnn hidden size).
      seed: python int used to derive the dropout mask.
      p: dropout probability.
      training: mirrors nn.Module.training; identity when False or p == 0.
    """
    if not training or not p:
        return x

    S, B, H = x.shape
    BH = B * H
    keep_prob = 1.0 - float(p)

    # One (1, B*H) mask shared by every time step: bernoulli(1-p) / (1-p),
    # built in x's dtype so the kernel multiplies natively.
    key = jax.random.PRNGKey(int(seed))
    keep = jax.random.bernoulli(key, p=keep_prob, shape=(1, BH))
    mask = jnp.where(keep, 1.0 / keep_prob, 0.0).astype(x.dtype)

    # Lane-dense layout: the whole (B, H) plane becomes the last (lane) axis.
    x_flat = x.reshape(S, BH)

    # Pad the lane axis to a multiple of 128 so stores are unmasked vst.
    # (No-op for the common case where B*H is already 128-aligned.)
    BH_pad = _round_up(BH, _LANE)
    if BH_pad != BH:
        pad = BH_pad - BH
        x_flat = jnp.pad(x_flat, ((0, 0), (0, pad)))
        mask = jnp.pad(mask, ((0, 0), (0, pad)))

    t_s, t_bh = _choose_tiles(S, BH_pad, x.dtype.itemsize)
    grid = (pl.cdiv(S, t_s), pl.cdiv(BH_pad, t_bh))

    out_flat = pl.pallas_call(
        _locked_dropout_kernel,
        out_shape=jax.ShapeDtypeStruct((S, BH_pad), x.dtype),
        grid=grid,
        in_specs=[
            pl.BlockSpec((1, t_bh), lambda s, j: (0, j)),     # mask: locked over S
            pl.BlockSpec((t_s, t_bh), lambda s, j: (s, j)),   # x tile
        ],
        out_specs=pl.BlockSpec((t_s, t_bh), lambda s, j: (s, j)),
        compiler_params=pltpu.CompilerParams(
            dimension_semantics=("parallel", "parallel"),
            vmem_limit_bytes=_VMEM_LIMIT_BYTES,
        ),
    )(mask, x_flat)

    if BH_pad != BH:
        out_flat = out_flat[:, :BH]
    return out_flat.reshape(S, B, H)


def _reference(x_np, seed, p):
    """Pure-numpy reference using the same mask derivation as the wrapper."""
    S, B, H = x_np.shape
    keep = np.asarray(
        jax.random.bernoulli(jax.random.PRNGKey(int(seed)), p=1.0 - p, shape=(1, B * H)))
    mask = np.where(keep, 1.0 / (1.0 - p), 0.0).astype(x_np.dtype).reshape(1, B, H)
    return x_np * mask


if __name__ == "__main__":
    p = 0.5
    seed = 1234

    # Case 1: 128-aligned lanes, single-block sequence.
    S, B, H = 8, 4, 32  # [sequence length, batch size, rnn hidden size]
    x = jax.random.normal(jax.random.PRNGKey(0), (S, B, H), dtype=jnp.float32)
    out = jax.block_until_ready(locked_dropout(x, seed=seed, p=p, training=True))
    out_np, x_np = np.asarray(out), np.asarray(x)

    expected = _reference(x_np, seed, p)
    assert np.allclose(out_np, expected, atol=1e-6), "kernel mismatch vs reference"

    # Mask locked across time: each (b, h) column is either zero at every step
    # or scaled at every step.
    dropped = (out_np == 0.0)
    for s in range(1, S):
        assert np.array_equal(dropped[s], dropped[0]), "mask must be locked across time"

    # Eval mode / p == 0 are identity.
    assert np.array_equal(
        np.asarray(locked_dropout(x, seed=seed, p=p, training=False)), x_np)
    assert np.array_equal(
        np.asarray(locked_dropout(x, seed=seed, p=0.0, training=True)), x_np)

    # Case 2: ragged lanes (B*H not a multiple of 128) + partial S block,
    # exercising the padding path and the >=2-step S grid.
    S2, B2, H2 = 12, 2, 40
    x2 = jax.random.normal(jax.random.PRNGKey(1), (S2, B2, H2), dtype=jnp.float32)
    out2 = jax.block_until_ready(locked_dropout(x2, seed=seed, p=p, training=True))
    expected2 = _reference(np.asarray(x2), seed, p)
    assert np.allclose(np.asarray(out2), expected2, atol=1e-6), "ragged-lane case mismatch"

    print("KERNEL_OK")
</pallas_src>

<mosaic_0001>
module attributes {stable_mosaic.version = 11 : i64} {
  func.func @_locked_dropout_kernel(%arg0: i32, %arg1: i32, %arg2: memref<1x128xf32, #tpu.memory_space<vmem>>, %arg3: memref<8x128xf32, #tpu.memory_space<vmem>>, %arg4: memref<8x128xf32, #tpu.memory_space<vmem>>) attributes {dimension_semantics = [#tpu.dimension_semantics<parallel>, #tpu.dimension_semantics<parallel>], iteration_bounds = array<i64: 1, 1>, scalar_prefetch = 0 : i64, scratch_operands = 0 : i64, tpu.core_type = #tpu.core_type<tc>, window_params = [{transform_indices = @transform_0, window_bounds = array<i64: 1, 128>}, {transform_indices = @transform_1, window_bounds = array<i64: 8, 128>}, {transform_indices = @transform_2, window_bounds = array<i64: 8, 128>}]} {
    %c0 = arith.constant 0 : index
    %c0_0 = arith.constant 0 : index
    %0 = vector.load %arg3[%c0, %c0_0] : memref<8x128xf32, #tpu.memory_space<vmem>>, vector<8x128xf32>
    %c0_1 = arith.constant 0 : index
    %c0_2 = arith.constant 0 : index
    %1 = vector.load %arg2[%c0_1, %c0_2] : memref<1x128xf32, #tpu.memory_space<vmem>>, vector<1x128xf32>
    %2 = vector.broadcast %1 : vector<1x128xf32> to vector<8x128xf32>
    %3 = arith.mulf %0, %2 : vector<8x128xf32>
    %c0_3 = arith.constant 0 : index
    %c0_4 = arith.constant 0 : index
    %4 = vector.load %arg4[%c0_3, %c0_4] : memref<8x128xf32, #tpu.memory_space<vmem>>, vector<8x128xf32>
    tpu.vector_store %arg4[%c0_3, %c0_4], %3 {strides = array<i32>} : memref<8x128xf32, #tpu.memory_space<vmem>>, vector<8x128xf32>,
    return
  }
  func.func @transform_0(%arg0: i32, %arg1: i32) -> (i32, i32) {
    %c0_i32 = arith.constant 0 : i32
    %c0_i32_0 = arith.constant 0 : i32
    return %c0_i32, %arg1 : i32, i32
  }
  func.func @transform_1(%arg0: i32, %arg1: i32) -> (i32, i32) {
    %c0_i32 = arith.constant 0 : i32
    return %arg0, %arg1 : i32, i32
  }
  func.func @transform_2(%arg0: i32, %arg1: i32) -> (i32, i32) {
    %c0_i32 = arith.constant 0 : i32
    return %arg0, %arg1 : i32, i32
  }
}

</mosaic_0001>

<llo_original>
// kernel: tpu_custom_call.1
$region0: #{tpu_custom_call.1}
  #allocation0 [shape = 'u32[]', space=smem, size = 0x4, offset = 0x4, fixed_abs, tag = 'smem constant byte address 0x4 - core index']
  #allocation1 [shape = 'u32[144,128]{1,0:T(1,128)}', space=vmem, size = 0x12000, scoped, tag = 'internal scratch']
  %s0 = inlined_call_operand.hbm [shape: f32[1,128], index: 0, kind: input, shape index: {}]
  %s1 = inlined_call_operand.hbm [shape: f32[8,128], index: 1, kind: input, shape index: {}]
  %s2 = inlined_call_operand.hbm [shape: f32[8,128], index: 2, kind: output, shape index: {}]
  %s3 = sld [smem:[#allocation0]]
  $region26: #{tpu_custom_call.1} parent=0
    _
  %s5 = ssub.s32 1, %s3
  %s6 = scalar_select 0, %s5, %s3
  $region1: #{tpu_custom_call.1} parent=0
    #allocation2 [shape = 'u8[512]{0}', space=vmem, size = 0x400, scoped, tag = 'input window, operand 0, single buffered']
    #allocation3 [shape = 's32[1]{0}', space=sflag, size = 0x4, scoped, tag = 'scoped memory for tpu_custom_call.1']
    #allocation4 [shape = 's32[1]{0}', space=sflag, size = 0x4, scoped, tag = 'scoped memory for tpu_custom_call.1']
    #allocation5 [shape = 'u8[4096]{0}', space=vmem, size = 0x1000, scoped, tag = 'input window, operand 1, single buffered']
    #allocation6 [shape = 's32[1]{0}', space=sflag, size = 0x4, scoped, tag = 'scoped memory for tpu_custom_call.1']
    #allocation7 [shape = 'u8[4096]{0}', space=vmem, size = 0x1000, scoped, tag = 'output window, operand 0, single buffered']
    %7 = vsyncpa [#allocation3], 0
    %8 = vsyncpa [#allocation6], 0
    %9 = vsyncpa [#allocation4], 0
    // Predicated region
    $region2: #{tpu_custom_call.1} parent=1 // pred_check
      _
    $region3: #{tpu_custom_call.1} parent=1 // pred_check_branch
      %11 = sbr.rel (0) target = $region5
    $region4: #{tpu_custom_call.1} parent=1 // pred_region
      %s13 = ssub.s32 16, 16
      %14 = vsyncadd [#allocation3], %s13
      %s16 = sshll.u32 [#allocation2], 4
      %s17 = int_to_ptr.vmem [resolvable:$true] %s16
      %19 = dma.hbm_to_vmem [thread:$0]  %s0, 16, %s17, [#allocation3]
    $region5: #{tpu_custom_call.1} parent=1 // pred_fallthru
      _
    // Predicated region
    $region6: #{tpu_custom_call.1} parent=1 // pred_check
      _
    $region7: #{tpu_custom_call.1} parent=1 // pred_check_branch
      %21 = sbr.rel (0) target = $region9
    $region8: #{tpu_custom_call.1} parent=1 // pred_region
      %s23 = ssub.s32 128, 128
      %24 = vsyncadd [#allocation6], %s23
      %s26 = sshll.u32 [#allocation5], 4
      %s27 = int_to_ptr.vmem [resolvable:$true] %s26
      %29 = dma.hbm_to_vmem [thread:$0]  %s1, 128, %s27, [#allocation6]
    $region9: #{tpu_custom_call.1} parent=1 // pred_fallthru
      _
    // Predicated region
    $region10: #{tpu_custom_call.1} parent=1 // pred_check
      _
    $region11: #{tpu_custom_call.1} parent=1 // pred_check_branch
      %31 = sbr.rel (0) target = $region13
    $region12: #{tpu_custom_call.1} parent=1 // pred_region
      %32 = dma.done [#allocation3], 16
    $region13: #{tpu_custom_call.1} parent=1 // pred_fallthru
      _
    // Predicated region
    $region14: #{tpu_custom_call.1} parent=1 // pred_check
      _
    $region15: #{tpu_custom_call.1} parent=1 // pred_check_branch
      %34 = sbr.rel (0) target = $region17
    $region16: #{tpu_custom_call.1} parent=1 // pred_region
      %35 = dma.done [#allocation6], 128
    $region17: #{tpu_custom_call.1} parent=1 // pred_fallthru
      _
    %v36 = vld [vmem:[#allocation5] sm:$0xff]
    %v37 = vld [vmem:[#allocation2] sm:$0x1]
    %v39 = vlaneseq
    %v40 = vshrl.u32 %v39, 7
    %v41 = vsub.s32 0, %v40
    %v42 = vrot.slane %v37, %v41
    %v44 = vmul.f32 %v36, %v42
    %45 = vst [vmem:[#allocation7] sm:$0xff] %v44
    // Predicated region
    $region18: #{tpu_custom_call.1} parent=1 // pred_check
      _
    $region19: #{tpu_custom_call.1} parent=1 // pred_check_branch
      %47 = sbr.rel (0) target = $region21
    $region20: #{tpu_custom_call.1} parent=1 // pred_region
      %s49 = ssub.s32 128, 128
      %50 = vsyncadd [#allocation4], %s49
      %s52 = sshll.u32 [#allocation7], 4
      %s53 = int_to_ptr.vmem [resolvable:$true] %s52
      %55 = dma.vmem_to_hbm [thread:$0]  %s53, 128, %s2, [#allocation4]
    $region21: #{tpu_custom_call.1} parent=1 // pred_fallthru
      _
    // Predicated region
    $region22: #{tpu_custom_call.1} parent=1 // pred_check
      _
    $region23: #{tpu_custom_call.1} parent=1 // pred_check_branch
      %57 = sbr.rel (0) target = $region25
    $region24: #{tpu_custom_call.1} parent=1 // pred_region
      %58 = dma.done [#allocation4], 128
    $region25: #{tpu_custom_call.1} parent=1 // pred_fallthru
      _
    %59 = vsyncpa [#allocation3], 1
    %60 = vsyncpa [#allocation6], 1
    %61 = vsyncpa [#allocation4], 1

</llo_original>
